<compile_context>
chip_gen: v6e
topology: v6e:2x2x1
jax: 0.10.0
libtpu: 0.0.40
codegen_flags: <defaults>
</compile_context>

<pallas_src>
import jax
import jax.numpy as jnp
from jax.experimental import pallas as pl
from jax.experimental.pallas import tpu as pltpu

# A handful of parallel DMA descriptors saturates the HBM copy engines better than
# one giant descriptor; more than ~4-8 buys nothing.
_MAX_DMA_CHUNKS = 4


def _sublane_for_dtype(dtype) -> int:
    """Packed-sublane granularity: 8 for 32-bit, 16 for bf16/f16, 32 for int8/fp8."""
    itemsize = jnp.dtype(dtype).itemsize
    return max(8, 32 // max(1, itemsize))


def _make_dma_copy_kernel(chunks):
    """Build a kernel that copies static row-chunks HBM->HBM via async DMA.

    `chunks` is a static tuple of (row_start, row_size) pairs.
    Kernel signature: (x_hbm_ref, o_hbm_ref, dma_sems).
    """

    def kernel(x_hbm, o_hbm, sems):
        # Issue every chunked HBM->HBM DMA first so they all run in parallel ...
        for k, (start, size) in enumerate(chunks):
            pltpu.make_async_copy(
                x_hbm.at[pl.ds(start, size), :],
                o_hbm.at[pl.ds(start, size), :],
                sems.at[k],
            ).start()
        # ... then wait for all of them to complete.
        for k, (start, size) in enumerate(chunks):
            pltpu.make_async_copy(
                x_hbm.at[pl.ds(start, size), :],
                o_hbm.at[pl.ds(start, size), :],
                sems.at[k],
            ).wait()

    return kernel


def _pallas_identity_copy_2d(x2d):
    """Direct HBM->HBM DMA copy of a 2D array (rows, H) — no VMEM bounce."""
    rows, h = x2d.shape
    sub = _sublane_for_dtype(x2d.dtype)

    # Static, roughly-equal row chunks; all but (possibly) the last chunk start and
    # end on a dtype-aware sublane multiple so every DMA stays on the fast path.
    chunk_rows = -(-rows // _MAX_DMA_CHUNKS)          # ceil(rows / n_chunks)
    chunk_rows = -(-chunk_rows // sub) * sub          # round up to sublane multiple
    chunks = []
    start = 0
    while start < rows:
        size = min(chunk_rows, rows - start)
        chunks.append((start, size))
        start += size
    chunks = tuple(chunks)

    kernel = _make_dma_copy_kernel(chunks)
    return pl.pallas_call(
        kernel,
        out_shape=jax.ShapeDtypeStruct((rows, h), x2d.dtype),
        in_specs=[pl.BlockSpec(memory_space=pl.ANY)],   # raw HBM ref, no auto-DMA
        out_specs=pl.BlockSpec(memory_space=pl.ANY),    # raw HBM ref, written by DMA
        scratch_shapes=[pltpu.SemaphoreType.DMA((len(chunks),))],
    )(x2d)


def lora_compatible_linear_forward(hidden_states, scale=None, lora_scale: int = 1,
                                   *, use_pallas_copy: bool = False):
    """Pallas equivalent of _LoRACompatibleLinear.forward.

    The reference forward is an identity pass-through: `scale`, `lora_scale`
    and the module's own nn.Linear / LoRA weights are ignored.  By default we
    return `hidden_states` unchanged (zero-cost — no kernel, no HBM traffic).
    Set `use_pallas_copy=True` to materialize the identity through a chunked
    HBM->HBM DMA Pallas kernel instead (e.g. to force a fresh output buffer).
    """
    del scale, lora_scale  # ignored by the reference forward
    # TODO(synk): if the ReferenceNet override were NOT an identity (i.e. stock
    # diffusers LoRACompatibleLinear), this would need x @ W.T + b + LoRA branch.

    if not use_pallas_copy:
        # Perf-review fast path: eliminate the kernel entirely.
        return hidden_states

    if hidden_states.size == 0 or hidden_states.ndim == 0:
        return hidden_states

    h = hidden_states.shape[-1]
    rows = 1
    for d in hidden_states.shape[:-1]:
        rows *= d

    x2d = hidden_states.reshape(rows, h)
    out2d = _pallas_identity_copy_2d(x2d)
    return out2d.reshape(hidden_states.shape)


def init_linear_params(key, in_features: int, out_features: int):
    """nn.Linear-style params owned by the module but unused by its forward."""
    kw, kb = jax.random.split(key)
    bound = 1.0 / jnp.sqrt(in_features)
    weight = jax.random.uniform(kw, (out_features, in_features),
                                minval=-bound, maxval=bound, dtype=jnp.float32)
    bias = jax.random.uniform(kb, (out_features,),
                              minval=-bound, maxval=bound, dtype=jnp.float32)
    return {"weight": weight, "bias": bias}


if __name__ == "__main__":
    key = jax.random.PRNGKey(0)
    k_x1, k_x2, k_x3, k_p = jax.random.split(key, 4)

    # Parameters exist on the module (nn.Linear __init__) but forward ignores them.
    params = init_linear_params(k_p, 32, 32)

    # Case 1: small shape (batch=2, seq=8, hidden=32) -> zero-cost direct return
    # (the perf-review-preferred default path).
    x_small = jax.random.normal(k_x1, (2, 8, 32), dtype=jnp.float32)
    out_small = lora_compatible_linear_forward(x_small, scale=None, lora_scale=1)
    out_small = jax.block_until_ready(out_small)
    assert out_small.shape == x_small.shape
    assert out_small.dtype == x_small.dtype
    assert jnp.array_equal(out_small, x_small)

    # Case 2: f32 input exercising the chunked HBM->HBM DMA copy kernel
    # (rows = 32 -> 4 chunks of 8 sublane-aligned rows).
    x_dense = jax.random.normal(k_x2, (2, 16, 256), dtype=jnp.float32)
    out_dense = lora_compatible_linear_forward(
        x_dense, scale=None, lora_scale=1, use_pallas_copy=True)
    out_dense = jax.block_until_ready(out_dense)
    assert out_dense.shape == x_dense.shape
    assert out_dense.dtype == x_dense.dtype
    assert jnp.array_equal(out_dense, x_dense)

    # Case 3: bf16 input (dtype-aware sublane chunking: 16-row multiples).
    x_bf16 = jax.random.normal(k_x3, (2, 32, 256), dtype=jnp.float32).astype(jnp.bfloat16)
    out_bf16 = lora_compatible_linear_forward(
        x_bf16, scale=None, lora_scale=1, use_pallas_copy=True)
    out_bf16 = jax.block_until_ready(out_bf16)
    assert out_bf16.shape == x_bf16.shape
    assert out_bf16.dtype == x_bf16.dtype
    assert jnp.array_equal(out_bf16, x_bf16)

    print("KERNEL_OK")
</pallas_src>

<mosaic_0001>
module attributes {stable_mosaic.version = 11 : i64} {
  func.func @kernel(%arg0: memref<32x256xf32, #tpu.memory_space<any>>, %arg1: memref<32x256xf32, #tpu.memory_space<any>>, %arg2: memref<4x!tpu.dma_semaphore, #tpu.memory_space<semaphore_mem>>) attributes {dimension_semantics = [], scalar_prefetch = 0 : i64, scratch_operands = 1 : i64, tpu.core_type = #tpu.core_type<tc>} {
    %c0_i32 = arith.constant 0 : i32
    %c0_i32_0 = arith.constant 0 : i32
    %c0_i32_1 = arith.constant 0 : i32
    %0 = tpu.memref_slice %arg0[%c0_i32_0, %c0_i32_1] : memref<32x256xf32, #tpu.memory_space<any>> -> memref<8x256xf32, #tpu.memory_space<any>>
    %c0_i32_2 = arith.constant 0 : i32
    %c0_i32_3 = arith.constant 0 : i32
    %1 = tpu.memref_slice %arg1[%c0_i32_2, %c0_i32_3] : memref<32x256xf32, #tpu.memory_space<any>> -> memref<8x256xf32, #tpu.memory_space<any>>
    %2 = tpu.memref_slice %arg2[%c0_i32] : memref<4x!tpu.dma_semaphore, #tpu.memory_space<semaphore_mem>> -> memref<1x!tpu.dma_semaphore, #tpu.memory_space<semaphore_mem>>
    %3 = tpu.memref_squeeze %2 : memref<1x!tpu.dma_semaphore, #tpu.memory_space<semaphore_mem>> -> memref<!tpu.dma_semaphore, #tpu.memory_space<semaphore_mem>>
    tpu.enqueue_dma source(%0 : memref<8x256xf32, #tpu.memory_space<any>>) target(%1 : memref<8x256xf32, #tpu.memory_space<any>>) target_semaphore(%3 : memref<!tpu.dma_semaphore, #tpu.memory_space<semaphore_mem>>)
    %c1_i32 = arith.constant 1 : i32
    %c8_i32 = arith.constant 8 : i32
    %c0_i32_4 = arith.constant 0 : i32
    %4 = tpu.memref_slice %arg0[%c8_i32, %c0_i32_4] : memref<32x256xf32, #tpu.memory_space<any>> -> memref<8x256xf32, #tpu.memory_space<any>>
    %c8_i32_5 = arith.constant 8 : i32
    %c0_i32_6 = arith.constant 0 : i32
    %5 = tpu.memref_slice %arg1[%c8_i32_5, %c0_i32_6] : memref<32x256xf32, #tpu.memory_space<any>> -> memref<8x256xf32, #tpu.memory_space<any>>
    %6 = tpu.memref_slice %arg2[%c1_i32] : memref<4x!tpu.dma_semaphore, #tpu.memory_space<semaphore_mem>> -> memref<1x!tpu.dma_semaphore, #tpu.memory_space<semaphore_mem>>
    %7 = tpu.memref_squeeze %6 : memref<1x!tpu.dma_semaphore, #tpu.memory_space<semaphore_mem>> -> memref<!tpu.dma_semaphore, #tpu.memory_space<semaphore_mem>>
    tpu.enqueue_dma source(%4 : memref<8x256xf32, #tpu.memory_space<any>>) target(%5 : memref<8x256xf32, #tpu.memory_space<any>>) target_semaphore(%7 : memref<!tpu.dma_semaphore, #tpu.memory_space<semaphore_mem>>)
    %c2_i32 = arith.constant 2 : i32
    %c16_i32 = arith.constant 16 : i32
    %c0_i32_7 = arith.constant 0 : i32
    %8 = tpu.memref_slice %arg0[%c16_i32, %c0_i32_7] : memref<32x256xf32, #tpu.memory_space<any>> -> memref<8x256xf32, #tpu.memory_space<any>>
    %c16_i32_8 = arith.constant 16 : i32
    %c0_i32_9 = arith.constant 0 : i32
    %9 = tpu.memref_slice %arg1[%c16_i32_8, %c0_i32_9] : memref<32x256xf32, #tpu.memory_space<any>> -> memref<8x256xf32, #tpu.memory_space<any>>
    %10 = tpu.memref_slice %arg2[%c2_i32] : memref<4x!tpu.dma_semaphore, #tpu.memory_space<semaphore_mem>> -> memref<1x!tpu.dma_semaphore, #tpu.memory_space<semaphore_mem>>
    %11 = tpu.memref_squeeze %10 : memref<1x!tpu.dma_semaphore, #tpu.memory_space<semaphore_mem>> -> memref<!tpu.dma_semaphore, #tpu.memory_space<semaphore_mem>>
    tpu.enqueue_dma source(%8 : memref<8x256xf32, #tpu.memory_space<any>>) target(%9 : memref<8x256xf32, #tpu.memory_space<any>>) target_semaphore(%11 : memref<!tpu.dma_semaphore, #tpu.memory_space<semaphore_mem>>)
    %c3_i32 = arith.constant 3 : i32
    %c24_i32 = arith.constant 24 : i32
    %c0_i32_10 = arith.constant 0 : i32
    %12 = tpu.memref_slice %arg0[%c24_i32, %c0_i32_10] : memref<32x256xf32, #tpu.memory_space<any>> -> memref<8x256xf32, #tpu.memory_space<any>>
    %c24_i32_11 = arith.constant 24 : i32
    %c0_i32_12 = arith.constant 0 : i32
    %13 = tpu.memref_slice %arg1[%c24_i32_11, %c0_i32_12] : memref<32x256xf32, #tpu.memory_space<any>> -> memref<8x256xf32, #tpu.memory_space<any>>
    %14 = tpu.memref_slice %arg2[%c3_i32] : memref<4x!tpu.dma_semaphore, #tpu.memory_space<semaphore_mem>> -> memref<1x!tpu.dma_semaphore, #tpu.memory_space<semaphore_mem>>
    %15 = tpu.memref_squeeze %14 : memref<1x!tpu.dma_semaphore, #tpu.memory_space<semaphore_mem>> -> memref<!tpu.dma_semaphore, #tpu.memory_space<semaphore_mem>>
    tpu.enqueue_dma source(%12 : memref<8x256xf32, #tpu.memory_space<any>>) target(%13 : memref<8x256xf32, #tpu.memory_space<any>>) target_semaphore(%15 : memref<!tpu.dma_semaphore, #tpu.memory_space<semaphore_mem>>)
    %c0_i32_13 = arith.constant 0 : i32
    %c0_i32_14 = arith.constant 0 : i32
    %c0_i32_15 = arith.constant 0 : i32
    %16 = tpu.memref_slice %arg0[%c0_i32_14, %c0_i32_15] : memref<32x256xf32, #tpu.memory_space<any>> -> memref<8x256xf32, #tpu.memory_space<any>>
    %c0_i32_16 = arith.constant 0 : i32
    %c0_i32_17 = arith.constant 0 : i32
    %17 = tpu.memref_slice %arg1[%c0_i32_16, %c0_i32_17] : memref<32x256xf32, #tpu.memory_space<any>> -> memref<8x256xf32, #tpu.memory_space<any>>
    %18 = tpu.memref_slice %arg2[%c0_i32_13] : memref<4x!tpu.dma_semaphore, #tpu.memory_space<semaphore_mem>> -> memref<1x!tpu.dma_semaphore, #tpu.memory_space<semaphore_mem>>
    %19 = tpu.memref_squeeze %18 : memref<1x!tpu.dma_semaphore, #tpu.memory_space<semaphore_mem>> -> memref<!tpu.dma_semaphore, #tpu.memory_space<semaphore_mem>>
    tpu.wait_dma2 semaphore(%19 : memref<!tpu.dma_semaphore, #tpu.memory_space<semaphore_mem>>) src(%16 : memref<8x256xf32, #tpu.memory_space<any>>) dst(%17 : memref<8x256xf32, #tpu.memory_space<any>>)
    %c1_i32_18 = arith.constant 1 : i32
    %c8_i32_19 = arith.constant 8 : i32
    %c0_i32_20 = arith.constant 0 : i32
    %20 = tpu.memref_slice %arg0[%c8_i32_19, %c0_i32_20] : memref<32x256xf32, #tpu.memory_space<any>> -> memref<8x256xf32, #tpu.memory_space<any>>
    %c8_i32_21 = arith.constant 8 : i32
    %c0_i32_22 = arith.constant 0 : i32
    %21 = tpu.memref_slice %arg1[%c8_i32_21, %c0_i32_22] : memref<32x256xf32, #tpu.memory_space<any>> -> memref<8x256xf32, #tpu.memory_space<any>>
    %22 = tpu.memref_slice %arg2[%c1_i32_18] : memref<4x!tpu.dma_semaphore, #tpu.memory_space<semaphore_mem>> -> memref<1x!tpu.dma_semaphore, #tpu.memory_space<semaphore_mem>>
    %23 = tpu.memref_squeeze %22 : memref<1x!tpu.dma_semaphore, #tpu.memory_space<semaphore_mem>> -> memref<!tpu.dma_semaphore, #tpu.memory_space<semaphore_mem>>
    tpu.wait_dma2 semaphore(%23 : memref<!tpu.dma_semaphore, #tpu.memory_space<semaphore_mem>>) src(%20 : memref<8x256xf32, #tpu.memory_space<any>>) dst(%21 : memref<8x256xf32, #tpu.memory_space<any>>)
    %c2_i32_23 = arith.constant 2 : i32
    %c16_i32_24 = arith.constant 16 : i32
    %c0_i32_25 = arith.constant 0 : i32
    %24 = tpu.memref_slice %arg0[%c16_i32_24, %c0_i32_25] : memref<32x256xf32, #tpu.memory_space<any>> -> memref<8x256xf32, #tpu.memory_space<any>>
    %c16_i32_26 = arith.constant 16 : i32
    %c0_i32_27 = arith.constant 0 : i32
    %25 = tpu.memref_slice %arg1[%c16_i32_26, %c0_i32_27] : memref<32x256xf32, #tpu.memory_space<any>> -> memref<8x256xf32, #tpu.memory_space<any>>
    %26 = tpu.memref_slice %arg2[%c2_i32_23] : memref<4x!tpu.dma_semaphore, #tpu.memory_space<semaphore_mem>> -> memref<1x!tpu.dma_semaphore, #tpu.memory_space<semaphore_mem>>
    %27 = tpu.memref_squeeze %26 : memref<1x!tpu.dma_semaphore, #tpu.memory_space<semaphore_mem>> -> memref<!tpu.dma_semaphore, #tpu.memory_space<semaphore_mem>>
    tpu.wait_dma2 semaphore(%27 : memref<!tpu.dma_semaphore, #tpu.memory_space<semaphore_mem>>) src(%24 : memref<8x256xf32, #tpu.memory_space<any>>) dst(%25 : memref<8x256xf32, #tpu.memory_space<any>>)
    %c3_i32_28 = arith.constant 3 : i32
    %c24_i32_29 = arith.constant 24 : i32
    %c0_i32_30 = arith.constant 0 : i32
    %28 = tpu.memref_slice %arg0[%c24_i32_29, %c0_i32_30] : memref<32x256xf32, #tpu.memory_space<any>> -> memref<8x256xf32, #tpu.memory_space<any>>
    %c24_i32_31 = arith.constant 24 : i32
    %c0_i32_32 = arith.constant 0 : i32
    %29 = tpu.memref_slice %arg1[%c24_i32_31, %c0_i32_32] : memref<32x256xf32, #tpu.memory_space<any>> -> memref<8x256xf32, #tpu.memory_space<any>>
    %30 = tpu.memref_slice %arg2[%c3_i32_28] : memref<4x!tpu.dma_semaphore, #tpu.memory_space<semaphore_mem>> -> memref<1x!tpu.dma_semaphore, #tpu.memory_space<semaphore_mem>>
    %31 = tpu.memref_squeeze %30 : memref<1x!tpu.dma_semaphore, #tpu.memory_space<semaphore_mem>> -> memref<!tpu.dma_semaphore, #tpu.memory_space<semaphore_mem>>
    tpu.wait_dma2 semaphore(%31 : memref<!tpu.dma_semaphore, #tpu.memory_space<semaphore_mem>>) src(%28 : memref<8x256xf32, #tpu.memory_space<any>>) dst(%29 : memref<8x256xf32, #tpu.memory_space<any>>)
    return
  }
}

</mosaic_0001>

<llo_original>
// kernel: tpu_custom_call.1
$region0: #{tpu_custom_call.1}
  #allocation0 [shape = 'u32[]', space=smem, size = 0x4, offset = 0x4, fixed_abs, tag = 'smem constant byte address 0x4 - core index']
  #allocation1 [shape = 'u32[144,128]{1,0:T(1,128)}', space=vmem, size = 0x12000, scoped, tag = 'internal scratch']
  #allocation2 [shape = 's32[4]{0}', space=sflag, size = 0x10, scoped, tag = 'scratch operand']
  #allocation3 [shape = 's32[]', space=sflag, size = 0x4, offset = 0, fixed_abs, tag = 'sflag constant byte address 0x0 - dummy sync flag']
  #allocation4 [shape = 'u32[0]{0}', space=smem, size = 0, offset = 0, fixed_abs, tag = 'smem constant byte address 0x0 - null']
  #allocation5 [shape = 's32[]', space=sflag, size = 0x4, offset = 0, fixed_abs, tag = 'sflag constant byte address 0x0 - dummy sync flag']
  #allocation6 [shape = 'u32[0]{0}', space=smem, size = 0, offset = 0, fixed_abs, tag = 'smem constant byte address 0x0 - null']
  #allocation7 [shape = 's32[]', space=sflag, size = 0x4, offset = 0, fixed_abs, tag = 'sflag constant byte address 0x0 - dummy sync flag']
  #allocation8 [shape = 'u32[0]{0}', space=smem, size = 0, offset = 0, fixed_abs, tag = 'smem constant byte address 0x0 - null']
  #allocation9 [shape = 's32[]', space=sflag, size = 0x4, offset = 0, fixed_abs, tag = 'sflag constant byte address 0x0 - dummy sync flag']
  #allocation10 [shape = 'u32[0]{0}', space=smem, size = 0, offset = 0, fixed_abs, tag = 'smem constant byte address 0x0 - null']
  %s0 = inlined_call_operand.hbm [shape: f32[32,256], index: 0, kind: input, shape index: {}]
  %s1 = inlined_call_operand.hbm [shape: f32[32,256], index: 1, kind: output, shape index: {}]
  %s2 = sld [smem:[#allocation0]]
  $region2: #{tpu_custom_call.1} parent=0
    _
  %s4 = ssub.s32 1, %s2
  %s5 = scalar_select 0, %s4, %s2
  %s7 = sshll.u32 1, 14
  %s8 = sxor.u32 4294967295, %s7
  %12 = dma.general %s0, 256, %s1, [#allocation2], 131072, [#allocation4], 0, 0
  %s13 = scalar_lea.hbm %s0, 256
  %s14 = scalar_lea.hbm %s1, 256
  %s15 = scalar_lea.sflag [#allocation2], 1
  %s17 = sshll.u32 1, 14
  %s18 = sxor.u32 4294967295, %s17
  %22 = dma.general %s13, 256, %s14, %s15, 131072, [#allocation6], 0, 0
  %s23 = scalar_lea.hbm %s0, 512
  %s24 = scalar_lea.hbm %s1, 512
  %s25 = scalar_lea.sflag [#allocation2], 2
  %s27 = sshll.u32 1, 14
  %s28 = sxor.u32 4294967295, %s27
  %32 = dma.general %s23, 256, %s24, %s25, 131072, [#allocation8], 0, 0
  %s33 = scalar_lea.hbm %s0, 768
  %s34 = scalar_lea.hbm %s1, 768
  %s35 = scalar_lea.sflag [#allocation2], 3
  %s37 = sshll.u32 1, 14
  %s38 = sxor.u32 4294967295, %s37
  %42 = dma.general %s33, 256, %s34, %s35, 131072, [#allocation10], 0, 0
  %s43 = smul.u32 8, 1
  %s44 = smul.u32 %s43, 2
  %s45 = sshll.u32 %s44, 4
  %46 = dma.done [#allocation2], %s45
  %s47 = sshll.u32 %s44, 4
  %48 = dma.done %s15, %s47
  %s49 = sshll.u32 %s44, 4
  %50 = dma.done %s25, %s49
  %s51 = sshll.u32 %s44, 4
  %52 = dma.done %s35, %s51
  %53 = vsyncmov [#allocation2]
  %s54 = vpop.sfrf %53
  %p55 = scmp.eq.s32.totalorder %s54, 0
  %p56 = pneg %p55
  %58 = shalt.err (%p56)
  %s59 = scalar_lea.sflag [#allocation2], 1
  %60 = vsyncmov %s59
  %s61 = vpop.sfrf %60
  %p62 = scmp.eq.s32.totalorder %s61, 0
  %p63 = pneg %p62
  %65 = shalt.err (%p63)
  %s66 = scalar_lea.sflag [#allocation2], 2
  %67 = vsyncmov %s66
  %s68 = vpop.sfrf %67
  %p69 = scmp.eq.s32.totalorder %s68, 0
  %p70 = pneg %p69
  %72 = shalt.err (%p70)
  %s73 = scalar_lea.sflag [#allocation2], 3
  %74 = vsyncmov %s73
  %s75 = vpop.sfrf %74
  %p76 = scmp.eq.s32.totalorder %s75, 0
  %p77 = pneg %p76
  %79 = shalt.err (%p77)

</llo_original>
